<compile_context>
chip_gen: v5e
topology: v5e:2x2
jax: 0.10.0
libtpu: 0.0.40
codegen_flags: <defaults>
</compile_context>

<pallas_src>
import jax
import jax.numpy as jnp
from jax import lax
from jax.experimental import pallas as pl
from jax.experimental.pallas import tpu as pltpu


# ----------------------------- configuration --------------------------------
N = 128   # number of rows (batch of logits)
C = 32    # number of classes

LANE = 128  # TPU vreg lane width


# ------------------------------- kernel --------------------------------------
def cross_entropy_kernel(logits_ref, labels_ref, nll_ref):
    # logits_ref: (C, TILE_N) class-major tile; labels_ref: (1, TILE_N) int32.
    x = logits_ref[...].astype(jnp.float32)                    # (C, TILE_N)
    lbl = labels_ref[...]                                      # (1, TILE_N)

    # Numerically-stable shifted logits, computed once and reused.
    m = jnp.max(x, axis=0, keepdims=True)                      # (1, TILE_N)
    s = x - m                                                  # (C, TILE_N)
    lse_shift = jnp.log(jnp.sum(jnp.exp(s), axis=0, keepdims=True))  # (1, TILE_N)

    # Label pick via one-hot select + sublane sum (no hardware gather on TPU).
    cls = lax.broadcasted_iota(jnp.int32, x.shape, 0)          # (C, TILE_N)
    picked_shift = jnp.sum(jnp.where(cls == lbl, s, 0.0),
                           axis=0, keepdims=True)              # (1, TILE_N)

    # Per-row NLL = lse - picked  (the m terms cancel). Lane-dense store.
    nll_ref[...] = lse_shift - picked_shift                    # (1, TILE_N)


# ------------------------------ wrapper ---------------------------------------
def cross_entropy(outputs, labels):
    """outputs: (N, C) float logits, labels: (N,) int class ids -> scalar loss."""
    n, c = outputs.shape
    itemsize = jnp.dtype(outputs.dtype).itemsize

    # Class-major, lane-dense layout: classes on sublanes, rows on lanes.
    # (Dtype preserved: cast to f32 happens inside the kernel, so bf16 inputs
    #  keep the HBM->VMEM DMA at half width.)
    logits_cm = outputs.T                                  # (C, N)
    labels_ln = labels.astype(jnp.int32).reshape(1, n)     # (1, N)

    # Pad the row axis to a multiple of the lane width.
    n_pad = ((n + LANE - 1) // LANE) * LANE
    if n_pad != n:
        logits_cm = jnp.pad(logits_cm, ((0, 0), (0, n_pad - n)))
        labels_ln = jnp.pad(labels_ln, ((0, 0), (0, n_pad - n)))

    # Row-tile sizing: keep each (C, TILE_N) input buffer well under a few MiB
    # so double-buffering fits comfortably even on v7x's 64 MiB VMEM.
    budget = 4 << 20  # bytes per logits buffer
    bytes_per_col = max(c * itemsize, 1)
    max_tile = max(LANE, (budget // bytes_per_col) // LANE * LANE)
    tile_n = min(n_pad, max_tile)
    while n_pad % tile_n != 0:   # tile must evenly divide the padded row count
        tile_n -= LANE
    grid = (n_pad // tile_n,)

    cost = pl.CostEstimate(
        flops=int(5 * n * c),
        transcendentals=int(n * c),
        bytes_accessed=int(n * c * itemsize + 2 * n * 4),
    )

    nll = pl.pallas_call(
        cross_entropy_kernel,
        out_shape=jax.ShapeDtypeStruct((1, n_pad), jnp.float32),
        grid=grid,
        in_specs=[
            pl.BlockSpec((c, tile_n), lambda i: (0, i)),   # logits (class-major)
            pl.BlockSpec((1, tile_n), lambda i: (0, i)),   # labels
        ],
        out_specs=pl.BlockSpec((1, tile_n), lambda i: (0, i)),
        compiler_params=pltpu.CompilerParams(
            dimension_semantics=("parallel",),   # row tiles shard across TCs on v7x
            vmem_limit_bytes=32 << 20,
        ),
        cost_estimate=cost,
    )(logits_cm, labels_ln)

    # Mean over the *true* N only; padded rows are masked out by the slice.
    return jnp.sum(nll[0, :n]) / n


# ----------------------- pure-JAX reference (for checking) --------------------
def ref_cross_entropy(outputs, labels):
    logp = jax.nn.log_softmax(outputs.astype(jnp.float32), axis=-1)
    nll = -jnp.take_along_axis(logp, labels[:, None].astype(jnp.int32), axis=-1)[:, 0]
    return jnp.mean(nll)


# --------------------------------- main ----------------------------------------
if __name__ == "__main__":
    key = jax.random.PRNGKey(0)
    k_logits, k_labels = jax.random.split(key)

    outputs = jax.random.normal(k_logits, (N, C), jnp.float32)
    labels = jax.random.randint(k_labels, (N,), 0, C, dtype=jnp.int32)

    loss = jax.block_until_ready(cross_entropy(outputs, labels))
    expected = ref_cross_entropy(outputs, labels)

    assert loss.shape == (), loss.shape
    assert jnp.allclose(loss, expected, rtol=1e-5, atol=1e-5), (
        float(loss), float(expected))

    print("KERNEL_OK")
</pallas_src>

<mosaic_0001>
module attributes {stable_mosaic.version = 11 : i64} {
  func.func @cross_entropy_kernel(%arg0: i32, %arg1: memref<32x128xf32, #tpu.memory_space<vmem>>, %arg2: memref<1x128xi32, #tpu.memory_space<vmem>>, %arg3: memref<1x128xf32, #tpu.memory_space<vmem>>) attributes {dimension_semantics = [#tpu.dimension_semantics<parallel>], iteration_bounds = array<i64: 1>, scalar_prefetch = 0 : i64, scratch_operands = 0 : i64, tpu.core_type = #tpu.core_type<tc>, window_params = [{transform_indices = @transform_0, window_bounds = array<i64: 32, 128>}, {transform_indices = @transform_1, window_bounds = array<i64: 1, 128>}, {transform_indices = @transform_2, window_bounds = array<i64: 1, 128>}]} {
    %c0 = arith.constant 0 : index
    %c0_0 = arith.constant 0 : index
    %0 = vector.load %arg1[%c0, %c0_0] : memref<32x128xf32, #tpu.memory_space<vmem>>, vector<32x128xf32>
    %c0_1 = arith.constant 0 : index
    %c0_2 = arith.constant 0 : index
    %1 = vector.load %arg2[%c0_1, %c0_2] : memref<1x128xi32, #tpu.memory_space<vmem>>, vector<1x128xi32>
    %cst = arith.constant dense<0xFF800000> : vector<128xf32>
    %2 = vector.multi_reduction <maximumf>, %0, %cst [0] : vector<32x128xf32> to vector<128xf32>
    %3 = vector.shape_cast %2 : vector<128xf32> to vector<1x128xf32>
    %4 = vector.broadcast %3 : vector<1x128xf32> to vector<32x128xf32>
    %5 = arith.subf %0, %4 : vector<32x128xf32>
    %6 = math.exp %5 : vector<32x128xf32>
    %cst_3 = arith.constant dense<0.000000e+00> : vector<128xf32>
    %7 = vector.multi_reduction <add>, %6, %cst_3 [0] : vector<32x128xf32> to vector<128xf32>
    %8 = vector.shape_cast %7 : vector<128xf32> to vector<1x128xf32>
    %9 = math.log %8 : vector<1x128xf32>
    %10 = tpu.iota {dimensions = array<i32: 0>} : vector<32x128xi32>
    %11 = vector.broadcast %1 : vector<1x128xi32> to vector<32x128xi32>
    %12 = arith.cmpi eq, %10, %11 : vector<32x128xi32>
    %cst_4 = arith.constant 0.000000e+00 : f32
    %13 = vector.broadcast %cst_4 : f32 to vector<32x128xf32>
    %14 = arith.select %12, %5, %13 : vector<32x128xi1>, vector<32x128xf32>
    %cst_5 = arith.constant dense<0.000000e+00> : vector<128xf32>
    %15 = vector.multi_reduction <add>, %14, %cst_5 [0] : vector<32x128xf32> to vector<128xf32>
    %16 = vector.shape_cast %15 : vector<128xf32> to vector<1x128xf32>
    %17 = arith.subf %9, %16 : vector<1x128xf32>
    %c0_6 = arith.constant 0 : index
    %c0_7 = arith.constant 0 : index
    %18 = vector.load %arg3[%c0_6, %c0_7] : memref<1x128xf32, #tpu.memory_space<vmem>>, vector<1x128xf32>
    tpu.vector_store %arg3[%c0_6, %c0_7], %17 {strides = array<i32>} : memref<1x128xf32, #tpu.memory_space<vmem>>, vector<1x128xf32>,
    return
  }
  func.func @transform_0(%arg0: i32) -> (i32, i32) {
    %c0_i32 = arith.constant 0 : i32
    %c0_i32_0 = arith.constant 0 : i32
    return %c0_i32, %arg0 : i32, i32
  }
  func.func @transform_1(%arg0: i32) -> (i32, i32) {
    %c0_i32 = arith.constant 0 : i32
    %c0_i32_0 = arith.constant 0 : i32
    return %c0_i32, %arg0 : i32, i32
  }
  func.func @transform_2(%arg0: i32) -> (i32, i32) {
    %c0_i32 = arith.constant 0 : i32
    %c0_i32_0 = arith.constant 0 : i32
    return %c0_i32, %arg0 : i32, i32
  }
}

</mosaic_0001>

<llo_original>
// kernel: tpu_custom_call.1
$region0: #{tpu_custom_call.1}
  #allocation0 [shape = 'u32[]', space=smem, size = 0x4, offset = 0x4, fixed_abs, tag = 'smem constant byte address 0x4 - core index']
  #allocation1 [shape = 'u32[72,128]{1,0:T(1,128)}', space=vmem, size = 0x9000, scoped, tag = 'internal scratch']
  %s0 = inlined_call_operand.hbm [shape: f32[32,128], index: 0, kind: input, shape index: {}]
  %s1 = inlined_call_operand.hbm [shape: s32[1,128], index: 1, kind: input, shape index: {}]
  %s2 = inlined_call_operand.hbm [shape: f32[1,128], index: 2, kind: output, shape index: {}]
  %s3 = sld [smem:[#allocation0]]
  $region26: #{tpu_custom_call.1} parent=0
    _
  %s5 = ssub.s32 1, %s3
  %s6 = scalar_select 0, %s5, %s3
  $region1: #{tpu_custom_call.1} parent=0
    #allocation2 [shape = 'u8[16384]{0}', space=vmem, size = 0x4000, scoped, tag = 'input window, operand 0, single buffered']
    #allocation3 [shape = 's32[1]{0}', space=sflag, size = 0x4, scoped, tag = 'scoped memory for tpu_custom_call.1']
    #allocation4 [shape = 's32[1]{0}', space=sflag, size = 0x4, scoped, tag = 'scoped memory for tpu_custom_call.1']
    #allocation5 [shape = 'u8[512]{0}', space=vmem, size = 0x400, scoped, tag = 'input window, operand 1, single buffered']
    #allocation6 [shape = 's32[1]{0}', space=sflag, size = 0x4, scoped, tag = 'scoped memory for tpu_custom_call.1']
    #allocation7 [shape = 'u8[512]{0}', space=vmem, size = 0x400, scoped, tag = 'output window, operand 0, single buffered']
    %7 = vsyncpa [#allocation3], 0
    %8 = vsyncpa [#allocation6], 0
    %9 = vsyncpa [#allocation4], 0
    // Predicated region
    $region2: #{tpu_custom_call.1} parent=1 // pred_check
      _
    $region3: #{tpu_custom_call.1} parent=1 // pred_check_branch
      %11 = sbr.rel (0) target = $region5
    $region4: #{tpu_custom_call.1} parent=1 // pred_region
      %13 = vsyncadd [#allocation3], 0
      %s14 = sshll.u32 %s0, 4
      %s15 = int_to_ptr.hbm [resolvable:$true] %s14
      %s16 = sshll.u32 [#allocation2], 4
      %s17 = int_to_ptr.vmem [resolvable:$true] %s16
      %22 = dma.hbm_to_vmem [thread:$0]  %s15, 512, %s17, [#allocation3], 128, 128, 8
    $region5: #{tpu_custom_call.1} parent=1 // pred_fallthru
      _
    // Predicated region
    $region6: #{tpu_custom_call.1} parent=1 // pred_check
      _
    $region7: #{tpu_custom_call.1} parent=1 // pred_check_branch
      %24 = sbr.rel (0) target = $region9
    $region8: #{tpu_custom_call.1} parent=1 // pred_region
      %26 = vsyncadd [#allocation6], 0
      %s28 = sshll.u32 %s1, 4
      %s29 = int_to_ptr.hbm [resolvable:$true] %s28
      %s30 = sshll.u32 [#allocation5], 4
      %s31 = int_to_ptr.vmem [resolvable:$true] %s30
      %33 = dma.hbm_to_vmem [thread:$0]  %s29, 16, %s31, [#allocation6]
    $region9: #{tpu_custom_call.1} parent=1 // pred_fallthru
      _
    // Predicated region
    $region10: #{tpu_custom_call.1} parent=1 // pred_check
      _
    $region11: #{tpu_custom_call.1} parent=1 // pred_check_branch
      %35 = sbr.rel (0) target = $region13
    $region12: #{tpu_custom_call.1} parent=1 // pred_region
      %37 = dma.done [#allocation3], 512
    $region13: #{tpu_custom_call.1} parent=1 // pred_fallthru
      _
    // Predicated region
    $region14: #{tpu_custom_call.1} parent=1 // pred_check
      _
    $region15: #{tpu_custom_call.1} parent=1 // pred_check_branch
      %39 = sbr.rel (0) target = $region17
    $region16: #{tpu_custom_call.1} parent=1 // pred_region
      %41 = dma.done [#allocation6], 16
    $region17: #{tpu_custom_call.1} parent=1 // pred_fallthru
      _
    %v42 = vld [vmem:[#allocation2] sm:$0xff]
    %v43 = vld [vmem:[#allocation2 + $0x8] sm:$0xff]
    %v44 = vld [vmem:[#allocation2 + $0x10] sm:$0xff]
    %v45 = vld [vmem:[#allocation2 + $0x18] sm:$0xff]
    %v46 = vld [vmem:[#allocation5] sm:$0x1]
    %v47 = vmax.f32 %v42, %v43
    %v48 = vmax.f32 %v44, %v45
    %v49 = vmax.f32 %v47, %v48
    %v50 = vrot.slane %v49, 4
    %v51 = vmax.f32 %v49, %v50
    %v52 = vrot.slane %v51, 2
    %v53 = vmax.f32 %v51, %v52
    %v54 = vrot.slane %v53, 1
    %v55 = vmax.f32 %v53, %v54
    %v56 = vsub.f32 %v42, %v55
    %v57 = vsub.f32 %v43, %v55
    %v58 = vsub.f32 %v44, %v55
    %v59 = vsub.f32 %v45, %v55
    %v60 = vmul.f32 %v56, 1.442695
    %v61 = vpow.pop %v60
    %v62 = vmul.f32 %v57, 1.442695
    %v63 = vpow.pop %v62
    %v64 = vmul.f32 %v58, 1.442695
    %v65 = vpow.pop %v64
    %v66 = vmul.f32 %v59, 1.442695
    %v67 = vpow.pop %v66
    %v68 = vadd.f32 %v61, %v63
    %v69 = vadd.f32 %v68, %v65
    %v70 = vadd.f32 %v69, %v67
    %v71 = vrot.slane %v70, 4
    %v72 = vadd.f32 %v70, %v71
    %v73 = vrot.slane %v72, 2
    %v74 = vadd.f32 %v72, %v73
    %v75 = vrot.slane %v74, 1
    %v76 = vadd.f32 %v74, %v75
    %v77 = vlog2.pop %v76
    %v78 = vmul.f32 %v77, 0.6931472
    %v79 = vlaneseq
    %v80 = vshrl.u32 %v79, 7
    %v81 = vadd.s32 %v80, 8
    %v82 = vadd.s32 %v80, 16
    %v83 = vadd.s32 %v80, 24
    %v84 = vperm.slane %v46, 0
    %vm85 = vcmp.eq.s32.totalorder %v80, %v84
    %vm86 = vcmp.eq.s32.totalorder %v81, %v84
    %vm87 = vcmp.eq.s32.totalorder %v82, %v84
    %vm88 = vcmp.eq.s32.totalorder %v83, %v84
    %v89 = vsel %vm85, %v56, 0.0
    %v90 = vsel %vm86, %v57, 0.0
    %v91 = vsel %vm87, %v58, 0.0
    %v92 = vsel %vm88, %v59, 0.0
    %v93 = vadd.f32 %v89, %v90
    %v94 = vadd.f32 %v93, %v91
    %v95 = vadd.f32 %v94, %v92
    %v96 = vrot.slane %v95, 4
    %v97 = vadd.f32 %v95, %v96
    %v98 = vrot.slane %v97, 2
    %v99 = vadd.f32 %v97, %v98
    %v100 = vrot.slane %v99, 1
    %v101 = vadd.f32 %v99, %v100
    %v102 = vsub.f32 %v78, %v101
    %103 = vst [vmem:[#allocation7] sm:$0x1] %v102
    // Predicated region
    $region18: #{tpu_custom_call.1} parent=1 // pred_check
      _
    $region19: #{tpu_custom_call.1} parent=1 // pred_check_branch
      %105 = sbr.rel (0) target = $region21
    $region20: #{tpu_custom_call.1} parent=1 // pred_region
      %107 = vsyncadd [#allocation4], 0
      %s109 = sshll.u32 [#allocation7], 4
      %s110 = int_to_ptr.vmem [resolvable:$true] %s109
      %s111 = sshll.u32 %s2, 4
      %s112 = int_to_ptr.hbm [resolvable:$true] %s111
      %114 = dma.vmem_to_hbm [thread:$0]  %s110, 16, %s112, [#allocation4]
    $region21: #{tpu_custom_call.1} parent=1 // pred_fallthru
      _
    // Predicated region
    $region22: #{tpu_custom_call.1} parent=1 // pred_check
      _
    $region23: #{tpu_custom_call.1} parent=1 // pred_check_branch
      %116 = sbr.rel (0) target = $region25
    $region24: #{tpu_custom_call.1} parent=1 // pred_region
      %118 = dma.done [#allocation4], 16
    $region25: #{tpu_custom_call.1} parent=1 // pred_fallthru
      _
    %119 = vsyncpa [#allocation3], 1
    %120 = vsyncpa [#allocation6], 1
    %121 = vsyncpa [#allocation4], 1

</llo_original>
